<compile_context>
chip_gen: v6e
topology: v6e:2x2x1
jax: 0.10.0
libtpu: 0.0.40
codegen_flags: <defaults>
</compile_context>

<pallas_src>
import functools

import jax
import jax.numpy as jnp
from jax.experimental import pallas as pl
from jax.experimental.pallas import tpu as pltpu

HID_SIZE = 128
TILE_B_MAX = 512      # batch tile cap: double-buffered x+out tiles stay << scoped VMEM


def _round_up(n, m):
    return ((n + m - 1) // m) * m


def _a2c_kernel(x_ref, w1_ref, wh_ref, b_ref, code_ref, out_ref, *,
                hid_size, head_w):
    # bf16 MXU operands, f32 accumulation; all activation math stays f32.
    x = x_ref[...].astype(jnp.bfloat16)
    b = b_ref[...]                      # (2, common_w) f32: row0 = b1, row1 = head biases
    code = code_ref[...]                # (1, head_w) int32: 0 = mu, 1 = var, 2 = value/pad

    # base = ReLU(x @ W1 + b1)          -> (TILE_B, HID_SIZE), one MXU matmul
    base = jnp.dot(x, w1_ref[...], preferred_element_type=jnp.float32)
    base = jnp.maximum(base + b[0:1, :hid_size], 0.0)

    # One fused lane-dense head matmul: pre = base @ [Wmu | Wvar | Wv | 0-pad]
    pre = jnp.dot(base.astype(jnp.bfloat16), wh_ref[...],
                  preferred_element_type=jnp.float32)
    pre = pre + b[1:2, :head_w]

    # Shared-exp epilogue: one exp + one log1p (+ cheap approx rcp) instead of
    # tanh + exp + log1p.
    #   e = exp(-|pre|)
    #   softplus(pre) = relu(pre) + log1p(e)                 (numerically stable)
    #   tanh(pre)     = sign(pre) * (1 - e^2) / (1 + e^2)
    e = jnp.exp(-jnp.abs(pre))
    e2 = e * e
    softplus_out = jnp.maximum(pre, 0.0) + jnp.log1p(e)
    sgn = jnp.where(pre >= 0.0, 1.0, -1.0)
    tanh_out = sgn * (1.0 - e2) * pl.reciprocal(1.0 + e2, approx=True)

    # Per-column activation selected by the precomputed lane code.
    out_ref[...] = jnp.where(code == 0, tanh_out,
                             jnp.where(code == 1, softplus_out, pre))


def pack_params(params, act_size):
    """Fuse the three heads into one lane-dense bf16 weight matrix + stacked biases."""
    heads_w = jnp.concatenate([params["wmu"], params["wvar"], params["wv"]], axis=1)
    heads_b = jnp.concatenate([params["bmu"], params["bvar"], params["bv"]], axis=1)
    n_head_cols = 2 * act_size + 1
    head_w = _round_up(n_head_cols, 128)            # lane-dense output width
    common_w = max(HID_SIZE, head_w)

    wheads = jnp.pad(heads_w, ((0, 0), (0, head_w - n_head_cols)))
    bheads = jnp.pad(heads_b, ((0, 0), (0, common_w - n_head_cols)))
    b1 = jnp.pad(params["b1"], ((0, 0), (0, common_w - HID_SIZE)))
    biases = jnp.concatenate([b1, bheads], axis=0)  # (2, common_w) f32

    # Precomputed per-lane activation code (0 = tanh, 1 = softplus, 2 = identity).
    col = jnp.arange(head_w, dtype=jnp.int32)
    lane_code = jnp.where(col < act_size, 0,
                          jnp.where(col < 2 * act_size, 1, 2)).reshape(1, head_w)

    return dict(
        w1=params["w1"].astype(jnp.bfloat16),       # MXU operands stored bf16
        wheads=wheads.astype(jnp.bfloat16),
        biases=biases.astype(jnp.float32),
        lane_code=lane_code.astype(jnp.int32),
        act_size=act_size, head_w=head_w)


def model_a2c_forward(x, packed):
    """x: (B, input_shape) f32.  packed: output of pack_params. Returns (mu, var, value)."""
    B, in_dim = x.shape
    act_size = packed["act_size"]
    head_w = packed["head_w"]
    common_w = packed["biases"].shape[1]

    # Batch tile: multiple of 8 (sublane), capped; weights are resident across steps.
    tile_b = min(TILE_B_MAX, _round_up(B, 8))
    b_pad = _round_up(B, tile_b)
    if b_pad != B:
        x = jnp.pad(x, ((0, b_pad - B), (0, 0)))
    grid = (b_pad // tile_b,)

    cost = pl.CostEstimate(
        flops=2 * b_pad * (in_dim * HID_SIZE + HID_SIZE * head_w),
        transcendentals=2 * b_pad * head_w,
        bytes_accessed=(b_pad * in_dim * 4                 # x
                        + in_dim * HID_SIZE * 2            # w1 (bf16)
                        + HID_SIZE * head_w * 2            # wheads (bf16)
                        + 2 * common_w * 4 + head_w * 4    # biases + lane_code
                        + b_pad * head_w * 4))             # out slab

    slab = pl.pallas_call(
        functools.partial(_a2c_kernel, hid_size=HID_SIZE, head_w=head_w),
        out_shape=jax.ShapeDtypeStruct((b_pad, head_w), jnp.float32),
        grid=grid,
        in_specs=[
            pl.BlockSpec((tile_b, in_dim), lambda i: (i, 0)),      # x: pipelined per tile
            pl.BlockSpec((in_dim, HID_SIZE), lambda i: (0, 0)),    # weights: DMA'd once,
            pl.BlockSpec((HID_SIZE, head_w), lambda i: (0, 0)),    #  VMEM-resident
            pl.BlockSpec((2, common_w), lambda i: (0, 0)),
            pl.BlockSpec((1, head_w), lambda i: (0, 0)),
        ],
        out_specs=pl.BlockSpec((tile_b, head_w), lambda i: (i, 0)),
        compiler_params=pltpu.CompilerParams(
            dimension_semantics=("parallel",)),                    # v7x megacore split
        cost_estimate=cost,
    )(x, packed["w1"], packed["wheads"], packed["biases"], packed["lane_code"])

    slab = slab[:B]
    mu = slab[:, :act_size]
    var = slab[:, act_size:2 * act_size]
    value = slab[:, 2 * act_size:2 * act_size + 1]
    return mu, var, value


def init_params(key, input_shape, act_size):
    """Deterministic init mimicking PyTorch nn.Linear default (U[-1/sqrt(fan_in), +])."""
    def linear(k, fan_in, fan_out):
        kw, kb = jax.random.split(k)
        bound = 1.0 / jnp.sqrt(fan_in)
        # stored as (in, out) so the kernel computes x @ W directly
        w = jax.random.uniform(kw, (fan_in, fan_out), jnp.float32, -bound, bound)
        b = jax.random.uniform(kb, (1, fan_out), jnp.float32, -bound, bound)
        return w, b

    k1, k2, k3, k4 = jax.random.split(key, 4)
    w1, b1 = linear(k1, input_shape, HID_SIZE)
    wmu, bmu = linear(k2, HID_SIZE, act_size)
    wvar, bvar = linear(k3, HID_SIZE, act_size)
    wv, bv = linear(k4, HID_SIZE, 1)
    return dict(w1=w1, b1=b1, wmu=wmu, bmu=bmu, wvar=wvar, bvar=bvar, wv=wv, bv=bv)


if __name__ == "__main__":
    key = jax.random.PRNGKey(0)
    k_param, k_x = jax.random.split(key)

    BATCH = 8
    INPUT_SHAPE = 32   # observation size
    ACT_SIZE = 8       # continuous action dimension

    params = init_params(k_param, INPUT_SHAPE, ACT_SIZE)
    packed = pack_params(params, ACT_SIZE)
    x = jax.random.normal(k_x, (BATCH, INPUT_SHAPE), jnp.float32)

    # Keep the op inside a jit (as it would sit inside the RL training step) so the
    # custom-call launch and weight staging amortize instead of repeating per call.
    fwd = jax.jit(lambda xx: model_a2c_forward(xx, packed))
    mu, var, value = fwd(x)
    jax.block_until_ready((mu, var, value))

    # Pure-JAX f32 reference against the ORIGINAL (unfused) parameters.
    # Kernel uses bf16 MXU operands + approx reciprocal, so tolerance is loosened.
    base_ref = jnp.maximum(x @ params["w1"] + params["b1"], 0.0)
    mu_ref = jnp.tanh(base_ref @ params["wmu"] + params["bmu"])
    var_ref = jax.nn.softplus(base_ref @ params["wvar"] + params["bvar"])
    val_ref = base_ref @ params["wv"] + params["bv"]

    assert mu.shape == (BATCH, ACT_SIZE)
    assert var.shape == (BATCH, ACT_SIZE)
    assert value.shape == (BATCH, 1)
    assert jnp.allclose(mu, mu_ref, atol=3e-2), float(jnp.max(jnp.abs(mu - mu_ref)))
    assert jnp.allclose(var, var_ref, atol=3e-2), float(jnp.max(jnp.abs(var - var_ref)))
    assert jnp.allclose(value, val_ref, atol=3e-2), float(jnp.max(jnp.abs(value - val_ref)))
    assert bool(jnp.all(var >= 0.0))   # softplus output is non-negative

    print("KERNEL_OK")
</pallas_src>

<mosaic_0001>
module attributes {stable_mosaic.version = 11 : i64} {
  func.func @_a2c_kernel(%arg0: i32, %arg1: memref<8x32xf32, #tpu.memory_space<vmem>>, %arg2: memref<32x128xbf16, #tpu.memory_space<vmem>>, %arg3: memref<128x128xbf16, #tpu.memory_space<vmem>>, %arg4: memref<2x128xf32, #tpu.memory_space<vmem>>, %arg5: memref<1x128xi32, #tpu.memory_space<vmem>>, %arg6: memref<8x128xf32, #tpu.memory_space<vmem>>) attributes {dimension_semantics = [#tpu.dimension_semantics<parallel>], iteration_bounds = array<i64: 1>, scalar_prefetch = 0 : i64, scratch_operands = 0 : i64, tpu.core_type = #tpu.core_type<tc>, window_params = [{transform_indices = @transform_0, window_bounds = array<i64: 8, 32>}, {pipeline_mode = #tpu.pipeline_mode<synchronous>, transform_indices = @transform_1, window_bounds = array<i64: 32, 128>}, {pipeline_mode = #tpu.pipeline_mode<synchronous>, transform_indices = @transform_2, window_bounds = array<i64: 128, 128>}, {pipeline_mode = #tpu.pipeline_mode<synchronous>, transform_indices = @transform_3, window_bounds = array<i64: 2, 128>}, {pipeline_mode = #tpu.pipeline_mode<synchronous>, transform_indices = @transform_4, window_bounds = array<i64: 1, 128>}, {transform_indices = @transform_5, window_bounds = array<i64: 8, 128>}]} {
    %c0 = arith.constant 0 : index
    %c0_0 = arith.constant 0 : index
    %0 = vector.load %arg1[%c0, %c0_0] : memref<8x32xf32, #tpu.memory_space<vmem>>, vector<8x32xf32>
    %1 = arith.truncf %0 : vector<8x32xf32> to vector<8x32xbf16>
    %c0_1 = arith.constant 0 : index
    %c0_2 = arith.constant 0 : index
    %2 = vector.load %arg4[%c0_1, %c0_2] : memref<2x128xf32, #tpu.memory_space<vmem>>, vector<2x128xf32>
    %c0_3 = arith.constant 0 : index
    %c0_4 = arith.constant 0 : index
    %3 = vector.load %arg5[%c0_3, %c0_4] : memref<1x128xi32, #tpu.memory_space<vmem>>, vector<1x128xi32>
    %c0_5 = arith.constant 0 : index
    %c0_6 = arith.constant 0 : index
    %4 = vector.load %arg2[%c0_5, %c0_6] : memref<32x128xbf16, #tpu.memory_space<vmem>>, vector<32x128xbf16>
    %cst = arith.constant dense<0.000000e+00> : vector<8x128xf32>
    %5 = tpu.matmul %1, %4, %cst {dimension_numbers = #tpu.dot_dimension_numbers<[1], [0], [0], [1], [0, 0, 1, 1], [], []>} : vector<8x32xbf16>, vector<32x128xbf16>, vector<8x128xf32> -> vector<8x128xf32>
    %6 = vector.extract_strided_slice %2 {offsets = [0, 0], sizes = [1, 128], strides = [1, 1]} : vector<2x128xf32> to vector<1x128xf32>
    %7 = vector.broadcast %6 : vector<1x128xf32> to vector<8x128xf32>
    %8 = arith.addf %5, %7 : vector<8x128xf32>
    %cst_7 = arith.constant 0.000000e+00 : f32
    %9 = vector.broadcast %cst_7 : f32 to vector<8x128xf32>
    %10 = arith.maximumf %8, %9 : vector<8x128xf32>
    %11 = arith.truncf %10 : vector<8x128xf32> to vector<8x128xbf16>
    %c0_8 = arith.constant 0 : index
    %c0_9 = arith.constant 0 : index
    %12 = vector.load %arg3[%c0_8, %c0_9] : memref<128x128xbf16, #tpu.memory_space<vmem>>, vector<128x128xbf16>
    %cst_10 = arith.constant dense<0.000000e+00> : vector<8x128xf32>
    %13 = tpu.matmul %11, %12, %cst_10 {dimension_numbers = #tpu.dot_dimension_numbers<[1], [0], [0], [1], [0, 0, 1, 1], [], []>} : vector<8x128xbf16>, vector<128x128xbf16>, vector<8x128xf32> -> vector<8x128xf32>
    %14 = vector.extract_strided_slice %2 {offsets = [1, 0], sizes = [1, 128], strides = [1, 1]} : vector<2x128xf32> to vector<1x128xf32>
    %15 = vector.broadcast %14 : vector<1x128xf32> to vector<8x128xf32>
    %16 = arith.addf %13, %15 : vector<8x128xf32>
    %17 = math.absf %16 : vector<8x128xf32>
    %cst_11 = arith.constant 0.000000e+00 : f32
    %18 = vector.broadcast %cst_11 : f32 to vector<8x128xf32>
    %19 = arith.subf %18, %17 : vector<8x128xf32>
    %20 = math.exp %19 : vector<8x128xf32>
    %21 = arith.mulf %20, %20 : vector<8x128xf32>
    %cst_12 = arith.constant 0.000000e+00 : f32
    %22 = vector.broadcast %cst_12 : f32 to vector<8x128xf32>
    %23 = arith.maximumf %16, %22 : vector<8x128xf32>
    %24 = math.log1p %20 : vector<8x128xf32>
    %25 = arith.addf %23, %24 : vector<8x128xf32>
    %cst_13 = arith.constant 0.000000e+00 : f32
    %26 = vector.broadcast %cst_13 : f32 to vector<8x128xf32>
    %27 = arith.cmpf oge, %16, %26 : vector<8x128xf32>
    %cst_14 = arith.constant 1.000000e+00 : f32
    %cst_15 = arith.constant -1.000000e+00 : f32
    %28 = vector.broadcast %cst_14 : f32 to vector<8x128xf32>
    %29 = vector.broadcast %cst_15 : f32 to vector<8x128xf32>
    %30 = arith.select %27, %28, %29 : vector<8x128xi1>, vector<8x128xf32>
    %cst_16 = arith.constant 1.000000e+00 : f32
    %31 = vector.broadcast %cst_16 : f32 to vector<8x128xf32>
    %32 = arith.subf %31, %21 : vector<8x128xf32>
    %33 = arith.mulf %30, %32 : vector<8x128xf32>
    %cst_17 = arith.constant 1.000000e+00 : f32
    %34 = vector.broadcast %cst_17 : f32 to vector<8x128xf32>
    %35 = arith.addf %34, %21 : vector<8x128xf32>
    %36 = tpu.reciprocal %35 {approx = true} : vector<8x128xf32> -> vector<8x128xf32>
    %37 = arith.mulf %33, %36 : vector<8x128xf32>
    %c0_i32 = arith.constant 0 : i32
    %38 = vector.broadcast %c0_i32 : i32 to vector<1x128xi32>
    %39 = arith.cmpi eq, %3, %38 : vector<1x128xi32>
    %c1_i32 = arith.constant 1 : i32
    %40 = vector.broadcast %c1_i32 : i32 to vector<1x128xi32>
    %41 = arith.cmpi eq, %3, %40 : vector<1x128xi32>
    %42 = vector.shape_cast %41 : vector<1x128xi1> to vector<1x128xi1>
    %43 = vector.broadcast %42 : vector<1x128xi1> to vector<8x128xi1>
    %44 = arith.select %43, %25, %16 : vector<8x128xi1>, vector<8x128xf32>
    %45 = vector.shape_cast %39 : vector<1x128xi1> to vector<1x128xi1>
    %46 = vector.broadcast %45 : vector<1x128xi1> to vector<8x128xi1>
    %47 = arith.select %46, %37, %44 : vector<8x128xi1>, vector<8x128xf32>
    %c0_18 = arith.constant 0 : index
    %c0_19 = arith.constant 0 : index
    %48 = vector.load %arg6[%c0_18, %c0_19] : memref<8x128xf32, #tpu.memory_space<vmem>>, vector<8x128xf32>
    tpu.vector_store %arg6[%c0_18, %c0_19], %47 {strides = array<i32>} : memref<8x128xf32, #tpu.memory_space<vmem>>, vector<8x128xf32>,
    return
  }
  func.func @transform_0(%arg0: i32) -> (i32, i32) {
    %c0_i32 = arith.constant 0 : i32
    %c0_i32_0 = arith.constant 0 : i32
    return %arg0, %c0_i32 : i32, i32
  }
  func.func @transform_1(%arg0: i32) -> (i32, i32) {
    %c0_i32 = arith.constant 0 : i32
    %c0_i32_0 = arith.constant 0 : i32
    %c0_i32_1 = arith.constant 0 : i32
    return %c0_i32, %c0_i32_0 : i32, i32
  }
  func.func @transform_2(%arg0: i32) -> (i32, i32) {
    %c0_i32 = arith.constant 0 : i32
    %c0_i32_0 = arith.constant 0 : i32
    %c0_i32_1 = arith.constant 0 : i32
    return %c0_i32, %c0_i32_0 : i32, i32
  }
  func.func @transform_3(%arg0: i32) -> (i32, i32) {
    %c0_i32 = arith.constant 0 : i32
    %c0_i32_0 = arith.constant 0 : i32
    %c0_i32_1 = arith.constant 0 : i32
    return %c0_i32, %c0_i32_0 : i32, i32
  }
  func.func @transform_4(%arg0: i32) -> (i32, i32) {
    %c0_i32 = arith.constant 0 : i32
    %c0_i32_0 = arith.constant 0 : i32
    %c0_i32_1 = arith.constant 0 : i32
    return %c0_i32, %c0_i32_0 : i32, i32
  }
  func.func @transform_5(%arg0: i32) -> (i32, i32) {
    %c0_i32 = arith.constant 0 : i32
    %c0_i32_0 = arith.constant 0 : i32
    return %arg0, %c0_i32 : i32, i32
  }
}

</mosaic_0001>

<llo_original>
// kernel: _lambda_.1
$region0: #{_lambda_.1}
  #allocation0 [shape = 'u32[]', space=smem, size = 0x4, offset = 0x4, fixed_abs, tag = 'smem constant byte address 0x4 - core index']
  #allocation1 [shape = 'u32[144,128]{1,0:T(1,128)}', space=vmem, size = 0x12000, scoped, tag = 'internal scratch']
  %s0 = inlined_call_operand.hbm [shape: f32[8,32], index: 0, kind: input, shape index: {}]
  %s1 = inlined_call_operand.hbm [shape: bf16[32,128], index: 1, kind: input, shape index: {}]
  %s2 = inlined_call_operand.hbm [shape: bf16[128,128], index: 2, kind: input, shape index: {}]
  %s3 = inlined_call_operand.vmem [shape: f32[2,128], index: 3, kind: input, shape index: {}]
  %s4 = inlined_call_operand.vmem [shape: s32[1,128], index: 4, kind: input, shape index: {}]
  %s5 = inlined_call_operand.vmem [shape: f32[8,128], index: 5, kind: output, shape index: {}]
  %s6 = sld [smem:[#allocation0]]
  $region42: #{_lambda_.1} parent=0
    _
  %s8 = ssub.s32 1, %s6
  %s9 = scalar_select 0, %s8, %s6
  $region1: #{_lambda_.1} parent=0
    #allocation2 [shape = 'u8[4096]{0}', space=vmem, size = 0x1000, scoped, tag = 'input window, operand 0, single buffered']
    #allocation3 [shape = 's32[1]{0}', space=sflag, size = 0x4, scoped, tag = 'scoped memory for _lambda_.1']
    #allocation4 [shape = 'u8[8192]{0}', space=vmem, size = 0x2000, scoped, tag = 'input window, operand 1, single buffered']
    #allocation5 [shape = 's32[1]{0}', space=sflag, size = 0x4, scoped, tag = 'scoped memory for _lambda_.1']
    #allocation6 [shape = 'u8[32768]{0}', space=vmem, size = 0x8000, scoped, tag = 'input window, operand 2, single buffered']
    %10 = vsyncpa [#allocation3], 0
    %11 = vsyncpa [#allocation5], 0
    // Predicated region
    $region2: #{_lambda_.1} parent=1 // pred_check
      _
    $region3: #{_lambda_.1} parent=1 // pred_check_branch
      %13 = sbr.rel (0) target = $region5
    $region4: #{_lambda_.1} parent=1 // pred_region
      %s15 = ssub.s32 128, 128
      %16 = vsyncadd [#allocation3], %s15
      %s18 = sshll.u32 [#allocation2], 4
      %s19 = int_to_ptr.vmem [resolvable:$true] %s18
      %21 = dma.hbm_to_vmem [thread:$0]  %s0, 128, %s19, [#allocation3]
    $region5: #{_lambda_.1} parent=1 // pred_fallthru
      _
    // Predicated region
    $region6: #{_lambda_.1} parent=1 // pred_check
      _
    $region7: #{_lambda_.1} parent=1 // pred_check_branch
      %23 = sbr.rel (0) target = $region9
    $region8: #{_lambda_.1} parent=1 // pred_region
      %s25 = ssub.s32 256, 256
      %26 = vsyncadd [#allocation5], %s25
      %s27 = sshll.u32 [#allocation4], 4
      %s28 = int_to_ptr.vmem [resolvable:$true] %s27
      %33 = dma.hbm_to_vmem [thread:$0]  %s1, 256, %s28, [#allocation5], 64, 64, 4
    $region9: #{_lambda_.1} parent=1 // pred_fallthru
      _
    // Predicated region
    $region10: #{_lambda_.1} parent=1 // pred_check
      _
    $region11: #{_lambda_.1} parent=1 // pred_check_branch
      %35 = sbr.rel (0) target = $region13
    $region12: #{_lambda_.1} parent=1 // pred_region
      %s37 = ssub.s32 1024, 1024
      %38 = vsyncadd [#allocation5], %s37
      %s39 = sshll.u32 [#allocation6], 4
      %s40 = int_to_ptr.vmem [resolvable:$true] %s39
      %45 = dma.hbm_to_vmem [thread:$0]  %s2, 1024, %s40, [#allocation5], 64, 64, 4
    $region13: #{_lambda_.1} parent=1 // pred_fallthru
      _
    // Predicated region
    $region14: #{_lambda_.1} parent=1 // pred_check
      _
    $region15: #{_lambda_.1} parent=1 // pred_check_branch
      %47 = sbr.rel (0) target = $region17
    $region16: #{_lambda_.1} parent=1 // pred_region
      _
    $region17: #{_lambda_.1} parent=1 // pred_fallthru
      _
    // Predicated region
    $region18: #{_lambda_.1} parent=1 // pred_check
      _
    $region19: #{_lambda_.1} parent=1 // pred_check_branch
      %49 = sbr.rel (0) target = $region21
    $region20: #{_lambda_.1} parent=1 // pred_region
      _
    $region21: #{_lambda_.1} parent=1 // pred_fallthru
      _
    // Predicated region
    $region22: #{_lambda_.1} parent=1 // pred_check
      _
    $region23: #{_lambda_.1} parent=1 // pred_check_branch
      %51 = sbr.rel (0) target = $region25
    $region24: #{_lambda_.1} parent=1 // pred_region
      %52 = dma.done [#allocation3], 128
    $region25: #{_lambda_.1} parent=1 // pred_fallthru
      _
    // Predicated region
    $region26: #{_lambda_.1} parent=1 // pred_check
      _
    $region27: #{_lambda_.1} parent=1 // pred_check_branch
      %54 = sbr.rel (0) target = $region29
    $region28: #{_lambda_.1} parent=1 // pred_region
      %55 = dma.done [#allocation5], 256
    $region29: #{_lambda_.1} parent=1 // pred_fallthru
      _
    // Predicated region
    $region30: #{_lambda_.1} parent=1 // pred_check
      _
    $region31: #{_lambda_.1} parent=1 // pred_check_branch
      %57 = sbr.rel (0) target = $region33
    $region32: #{_lambda_.1} parent=1 // pred_region
      %58 = dma.done [#allocation5], 1024
    $region33: #{_lambda_.1} parent=1 // pred_fallthru
      _
    %v60 = vld [vmem:[#allocation2] sm:$0xff]
    %v61 = vpack.c.bf16 %v60, %v60
    %v62 = vld [vmem:[%s3] sm:$0x3]
    %v63 = vld [vmem:[%s4] sm:$0x1]
    %v64 = vld [vmem:[#allocation4] sm:$0xf]
    %v65 = vld [vmem:[#allocation4 + $0x4] sm:$0xf]
    %v66 = vld [vmem:[#allocation4 + $0x8] sm:$0xf]
    %v67 = vld [vmem:[#allocation4 + $0xc] sm:$0xf]
    %v68 = vlaneseq
    %v69 = vshrl.u32 %v68, 7
    %v70 = vsub.s32 0, %v69
    %v71 = vrot.slane %v62, %v70
    %v76 = vunpack.c.l.b16 %v64
    %v77 = vunpack.c.l.b16 %v65
    %v78 = vunpack.c.l.b16 %v66
    %v79 = vunpack.c.l.b16 %v67
    %v80 = vpack.c.b16 %v77, %v76
    %v81 = vpack.c.b16 %v79, %v78
    %vm84 = vcmask 261120
    %v86 = vsel %vm84, %v61, 0
    %88 = vmatprep.subr.bf16.mxu0 0
    %89 = vmatpush1.bf16.msra.mxu0 0
    %90 = vmatprep.subr.bf16.mxu0 0
    %91 = vmatpush1.bf16.msra.mxu0 0
    %92 = vmatprep.subr.bf16.mxu0 0
    %93 = vmatpush1.bf16.msra.mxu0 0
    %94 = vmatprep.subr.bf16.mxu0 0
    %95 = vmatpush1.bf16.msra.mxu0 0
    %96 = vmatprep.subr.bf16.mxu0 0
    %97 = vmatpush1.bf16.msra.mxu0 0
    %98 = vmatprep.subr.bf16.mxu0 0
    %99 = vmatpush1.bf16.msra.mxu0 0
    %100 = vmatprep.subr.bf16.mxu0 0
    %101 = vmatpush1.bf16.msra.mxu0 %v81
    %102 = vmatprep.subr.bf16.mxu0 0
    %103 = vmatpush1.bf16.msra.mxu0 %v80
    %104 = vmatprep.subr.bf16.mxu0 0
    %105 = vmatpush2.bf16.msra.mxu0 0
    %106 = vmatprep.subr.bf16.mxu0 0
    %107 = vmatpush2.bf16.msra.mxu0 0
    %108 = vmatprep.subr.bf16.mxu0 0
    %109 = vmatpush2.bf16.msra.mxu0 0
    %110 = vmatprep.subr.bf16.mxu0 0
    %111 = vmatpush2.bf16.msra.mxu0 0
    %112 = vmatprep.subr.bf16.mxu0 0
    %113 = vmatpush2.bf16.msra.mxu0 0
    %114 = vmatprep.subr.bf16.mxu0 0
    %115 = vmatpush2.bf16.msra.mxu0 0
    %116 = vmatprep.subr.bf16.mxu0 0
    %117 = vmatpush2.bf16.msra.mxu0 0
    %118 = vmatprep.subr.bf16.mxu0 0
    %119 = vmatpush2.bf16.msra.mxu0 0
    %120 = vmatprep.mubr.bf16.mxu0 0
    %121 = vmatmul.mubr.bf16.gmra.mxu0 %v86
    %v122 = vpop.f32.mrf.mxu0
    %v123 = vadd.f32 %v71, %v122
    %v124 = vpop.f32.mrf.mxu0
    %v125 = vpop.f32.mrf.mxu0
    %v126 = vpop.f32.mrf.mxu0
    %127 = vdwg.mxu0
    %v128 = vmax.f32 %v123, 0.0
    %v129 = vpack.c.bf16 %v128, %v128
    %v130 = vld [vmem:[#allocation6] sm:$0xf]
    %v131 = vld [vmem:[#allocation6 + $0x4] sm:$0xf]
    %v132 = vld [vmem:[#allocation6 + $0x8] sm:$0xf]
    %v133 = vld [vmem:[#allocation6 + $0xc] sm:$0xf]
    %v134 = vld [vmem:[#allocation6 + $0x10] sm:$0xf]
    %v135 = vld [vmem:[#allocation6 + $0x14] sm:$0xf]
    %v136 = vld [vmem:[#allocation6 + $0x18] sm:$0xf]
    %v137 = vld [vmem:[#allocation6 + $0x1c] sm:$0xf]
    %v138 = vld [vmem:[#allocation6 + $0x20] sm:$0xf]
    %v139 = vld [vmem:[#allocation6 + $0x24] sm:$0xf]
    %v140 = vld [vmem:[#allocation6 + $0x28] sm:$0xf]
    %v141 = vld [vmem:[#allocation6 + $0x2c] sm:$0xf]
    %v142 = vld [vmem:[#allocation6 + $0x30] sm:$0xf]
    %v143 = vld [vmem:[#allocation6 + $0x34] sm:$0xf]
    %v144 = vld [vmem:[#allocation6 + $0x38] sm:$0xf]
    %v145 = vld [vmem:[#allocation6 + $0x3c] sm:$0xf]
    %v146 = vlaneseq
    %v147 = vshrl.u32 %v146, 7
    %v148 = vsub.s32 1, %v147
    %v149 = vrot.slane %v62, %v148
    %v166 = vunpack.c.l.b16 %v130
    %v167 = vunpack.c.l.b16 %v131
    %v168 = vunpack.c.l.b16 %v132
    %v169 = vunpack.c.l.b16 %v133
    %v170 = vunpack.c.l.b16 %v134
    %v171 = vunpack.c.l.b16 %v135
    %v172 = vunpack.c.l.b16 %v136
    %v173 = vunpack.c.l.b16 %v137
    %v174 = vunpack.c.l.b16 %v138
    %v175 = vunpack.c.l.b16 %v139
    %v176 = vunpack.c.l.b16 %v140
    %v177 = vunpack.c.l.b16 %v141
    %v178 = vunpack.c.l.b16 %v142
    %v179 = vunpack.c.l.b16 %v143
    %v180 = vunpack.c.l.b16 %v144
    %v181 = vunpack.c.l.b16 %v145
    %v182 = vpack.c.b16 %v167, %v166
    %v183 = vpack.c.b16 %v169, %v168
    %v184 = vpack.c.b16 %v171, %v170
    %v185 = vpack.c.b16 %v173, %v172
    %v186 = vpack.c.b16 %v175, %v174
    %v187 = vpack.c.b16 %v177, %v176
    %v188 = vpack.c.b16 %v179, %v178
    %v189 = vpack.c.b16 %v181, %v180
    %198 = vmatprep.subr.bf16.mxu0 0
    %199 = vmatpush1.bf16.msra.mxu0 %v189
    %200 = vmatprep.subr.bf16.mxu0 0
    %201 = vmatpush1.bf16.msra.mxu0 %v188
    %202 = vmatprep.subr.bf16.mxu0 0
    %203 = vmatpush1.bf16.msra.mxu0 %v187
    %204 = vmatprep.subr.bf16.mxu0 0
    %205 = vmatpush1.bf16.msra.mxu0 %v186
    %206 = vmatprep.subr.bf16.mxu0 0
    %207 = vmatpush1.bf16.msra.mxu0 %v185
    %208 = vmatprep.subr.bf16.mxu0 0
    %209 = vmatpush1.bf16.msra.mxu0 %v184
    %210 = vmatprep.subr.bf16.mxu0 0
    %211 = vmatpush1.bf16.msra.mxu0 %v183
    %212 = vmatprep.subr.bf16.mxu0 0
    %213 = vmatpush1.bf16.msra.mxu0 %v182
    %214 = vmatprep.subr.bf16.mxu0 0
    %215 = vmatpush2.bf16.msra.mxu0 0
    %216 = vmatprep.subr.bf16.mxu0 0
    %217 = vmatpush2.bf16.msra.mxu0 0
    %218 = vmatprep.subr.bf16.mxu0 0
    %219 = vmatpush2.bf16.msra.mxu0 0
    %220 = vmatprep.subr.bf16.mxu0 0
    %221 = vmatpush2.bf16.msra.mxu0 0
    %222 = vmatprep.subr.bf16.mxu0 0
    %223 = vmatpush2.bf16.msra.mxu0 0
    %224 = vmatprep.subr.bf16.mxu0 0
    %225 = vmatpush2.bf16.msra.mxu0 0
    %226 = vmatprep.subr.bf16.mxu0 0
    %227 = vmatpush2.bf16.msra.mxu0 0
    %228 = vmatprep.subr.bf16.mxu0 0
    %229 = vmatpush2.bf16.msra.mxu0 0
    %230 = vmatprep.mubr.bf16.mxu0 0
    %231 = vmatmul.mubr.bf16.gmra.mxu0 %v129
    %v232 = vpop.f32.mrf.mxu0
    %v233 = vadd.f32 %v149, %v232
    %v234 = vpop.f32.mrf.mxu0
    %v235 = vpop.f32.mrf.mxu0
    %v236 = vpop.f32.mrf.mxu0
    %237 = vdwg.mxu0
    %v238 = vand.u32 2147483647, %v233
    %v239 = vsub.f32 0.0, %v238
    %v240 = vmul.f32 %v239, 1.442695
    %v241 = vpow.pop %v240
    %v242 = vmul.f32 %v241, %v241
    %v243 = vmax.f32 %v233, 0.0
    %v244 = vadd.f32 %v241, 1.0
    %v245 = vlog2.pop %v244
    %v246 = vmul.f32 %v245, 0.6931472
    %v247 = vmul.f32 -0.5, %v241
    %v248 = vadd.f32 %v247, 1.0
    %v249 = vmul.f32 %v248, %v241
    %v250 = vand.u32 2147483647, %v241
    %vm251 = vcmp.lt.f32.partialorder %v250, 0.0004427343
    %v252 = vsel %vm251, %v249, %v246
    %v253 = vadd.f32 %v243, %v252
    %vm254 = vcmp.ge.f32.partialorder %v233, 0.0
    %v255 = vsel %vm254, 1.0, -1.0
    %v256 = vsub.f32 1.0, %v242
    %v257 = vmul.f32 %v255, %v256
    %v258 = vadd.f32 %v242, 1.0
    %v259 = vrcp.pop %v258
    %v260 = vmul.f32 %v257, %v259
    %vm261 = vcmp.eq.s32.totalorder %v63, 0
    %vm262 = vcmp.eq.s32.totalorder %v63, 1
    %v263 = vsel %vm262, 1, 0
    %v264 = vlaneseq
    %v265 = vshrl.u32 %v264, 7
    %v266 = vsub.s32 0, %v265
    %v267 = vrot.slane %v263, %v266
    %vm268 = vcmp.eq.s32.totalorder %v267, 1
    %v269 = vsel %vm268, %v253, %v233
    %v270 = vsel %vm261, 1, 0
    %v271 = vlaneseq
    %v272 = vshrl.u32 %v271, 7
    %v273 = vsub.s32 0, %v272
    %v274 = vrot.slane %v270, %v273
    %vm275 = vcmp.eq.s32.totalorder %v274, 1
    %v276 = vsel %vm275, %v260, %v269
    %277 = vst [vmem:[%s5] sm:$0xff] %v276
    // Predicated region
    $region34: #{_lambda_.1} parent=1 // pred_check
      _
    $region35: #{_lambda_.1} parent=1 // pred_check_branch
      %279 = sbr.rel (0) target = $region37
    $region36: #{_lambda_.1} parent=1 // pred_region
      _
    $region37: #{_lambda_.1} parent=1 // pred_fallthru
      _
    // Predicated region
    $region38: #{_lambda_.1} parent=1 // pred_check
      _
    $region39: #{_lambda_.1} parent=1 // pred_check_branch
      %281 = sbr.rel (0) target = $region41
    $region40: #{_lambda_.1} parent=1 // pred_region
      _
    $region41: #{_lambda_.1} parent=1 // pred_fallthru
      _
    %282 = vsyncpa [#allocation3], 1
    %283 = vsyncpa [#allocation5], 1

</llo_original>
